<compile_context>
chip_gen: v5e
topology: v5e:2x2
jax: 0.10.0
libtpu: 0.0.40
codegen_flags: <defaults>
</compile_context>

<pallas_src>
import functools

import jax
import jax.numpy as jnp
from jax.experimental import pallas as pl
from jax.experimental.pallas import tpu as pltpu


def _round_up(x, m):
    return (x + m - 1) // m * m


def _gather_rows(ids_ref, w_ref):
    """One-hot MXU gather: rows of the VMEM-resident table selected by ids."""
    ids = ids_ref[...]                                          # (T, 1) int32
    tokens = ids.shape[0]
    vocab = w_ref.shape[0]
    vocab_ids = jax.lax.broadcasted_iota(jnp.int32, (tokens, vocab), 1)
    one_hot = (vocab_ids == ids).astype(jnp.float32)            # (T, V)
    return jnp.dot(one_hot, w_ref[...].astype(jnp.float32),
                   preferred_element_type=jnp.float32)          # (T, E)


def _embed_kernel(ids_ref, w_ref, out_ref):
    """Eval path: pure embedding lookup for one T-token tile."""
    out_ref[...] = _gather_rows(ids_ref, w_ref).astype(out_ref.dtype)


def _embed_dropout_kernel(ids_ref, w_ref, rand_ref, out_ref, *, thresh, scale):
    """Train path: lookup + inverted dropout (integer-threshold keep mask)."""
    emb = _gather_rows(ids_ref, w_ref)                          # (T, E) f32
    keep = rand_ref[...] >= jnp.int32(thresh)                   # int compare only
    out_ref[...] = jnp.where(keep, emb * jnp.float32(scale),
                             jnp.float32(0.0)).astype(out_ref.dtype)


def embedding_forward(ids, weight, *, dropout_p=0.0, training=True, seed=0,
                      token_tile=256):
    """Pallas equivalent of `self.dropout(self.word_embedding(input))`.

    ids:    (B, S) int32 token indices in [0, total_words]  (padding_idx == total_words)
    weight: (total_words + 1, E) float32 embedding table (padding row already zero)
    returns (B, S, E) float32
    """
    B, S = ids.shape
    V1, E = weight.shape
    n_tokens = B * S

    p_eff = float(dropout_p) if training else 0.0
    if p_eff >= 1.0:                                            # nn.Dropout(p=1) -> zeros
        return jnp.zeros((B, S, E), dtype=jnp.float32)

    # Token tile: multiple of 8 sublanes, capped; pad the token axis to a whole
    # number of tiles using the padding index (its embedding row is zero).
    T = min(int(token_tile), _round_up(n_tokens, 8))
    n_padded = _round_up(n_tokens, T)
    n_tiles = n_padded // T
    pad_id = V1 - 1                                             # padding_idx = total_words

    ids_flat = ids.reshape(-1).astype(jnp.int32)
    ids_flat = jnp.pad(ids_flat, (0, n_padded - n_tokens), constant_values=pad_id)
    ids_col = ids_flat.reshape(n_padded, 1)

    table_bytes = V1 * E * 4
    # TODO(synk): very large vocabularies (> ~32 MiB table) need a streamed /
    # manual DMA-gather fallback instead of the resident-VMEM table path.
    if table_bytes > 32 * 1024 * 1024:
        raise NotImplementedError("embedding table too large for resident-VMEM path")

    out_bytes = n_padded * E * 4
    vmem_need = table_bytes + 6 * T * E * 4 + 2 * T * V1 * 4 + (1 << 20)
    compiler_params = pltpu.CompilerParams(
        dimension_semantics=("parallel",),
        vmem_limit_bytes=int(min(max(vmem_need, 32 * 1024 * 1024), 48 * 1024 * 1024)),
    )

    in_specs = [
        pl.BlockSpec((T, 1), lambda i: (i, 0)),                 # token-id tile
        pl.BlockSpec(memory_space=pltpu.MemorySpace.VMEM),      # whole table, VMEM-resident
    ]
    operands = [ids_col, weight.astype(jnp.float32)]
    bytes_accessed = n_padded * 4 + table_bytes + out_bytes

    if p_eff > 0.0:
        bits = jax.random.bits(jax.random.PRNGKey(seed), (n_padded, E),
                               dtype=jnp.uint32)
        rand = (bits >> 1).astype(jnp.int32)                    # uniform in [0, 2^31)
        thresh = min(int(round(p_eff * (1 << 31))), (1 << 31) - 1)
        scale = 1.0 / (1.0 - p_eff)
        kernel = functools.partial(_embed_dropout_kernel, thresh=thresh, scale=scale)
        in_specs.append(pl.BlockSpec((T, E), lambda i: (i, 0)))
        operands.append(rand)
        bytes_accessed += n_padded * E * 4
    else:
        kernel = _embed_kernel

    cost = pl.CostEstimate(flops=2 * n_padded * V1 * E, transcendentals=0,
                           bytes_accessed=int(bytes_accessed))

    out = pl.pallas_call(
        kernel,
        out_shape=jax.ShapeDtypeStruct((n_padded, E), jnp.float32),
        grid=(n_tiles,),
        in_specs=in_specs,
        out_specs=pl.BlockSpec((T, E), lambda i: (i, 0)),
        compiler_params=compiler_params,
        cost_estimate=cost,
    )(*operands)

    return out[:n_tokens].reshape(B, S, E)


def make_embedding_weight(key, total_words, embedding_size):
    """nn.Embedding default init: N(0, 1), with padding_idx row zeroed."""
    w = jax.random.normal(key, (total_words + 1, embedding_size), dtype=jnp.float32)
    w = w.at[total_words].set(0.0)                              # padding_idx = total_words
    return w


if __name__ == "__main__":
    # Small, deterministic configuration (options.*):
    total_words = 40            # options.total_words
    embed_size = 128            # options.word_embedding_size
    dropout_p = 0.1             # options.dropout
    B, S = 2, 8                 # small batch of token-id sequences

    key = jax.random.PRNGKey(0)
    k_w, k_ids = jax.random.split(key)

    weight = make_embedding_weight(k_w, total_words, embed_size)
    # ids in [0, total_words] inclusive so the padding index is exercised too.
    ids = jax.random.randint(k_ids, (B, S), 0, total_words + 1, dtype=jnp.int32)

    # Eval path (dropout is identity) — check against a plain-JAX reference.
    out_eval = jax.block_until_ready(
        embedding_forward(ids, weight, dropout_p=dropout_p, training=False))
    ref = jnp.take(weight, ids.reshape(-1), axis=0).reshape(B, S, embed_size)
    assert out_eval.shape == (B, S, embed_size)
    assert jnp.allclose(out_eval, ref, atol=1e-5), "embedding lookup mismatch"

    # Training path (inverted dropout; RNG stream differs from torch's).
    out_train = jax.block_until_ready(
        embedding_forward(ids, weight, dropout_p=dropout_p, training=True, seed=123))
    assert out_train.shape == (B, S, embed_size)
    scale = 1.0 / (1.0 - dropout_p)
    expected = jnp.where(out_train == 0.0, 0.0, ref * scale)
    assert jnp.allclose(out_train, expected, atol=1e-5), "dropout scaling mismatch"

    print("KERNEL_OK")
</pallas_src>

<mosaic_0001>
module attributes {stable_mosaic.version = 11 : i64} {
  func.func @_embed_kernel(%arg0: i32, %arg1: memref<16x1xi32, #tpu.memory_space<vmem>>, %arg2: memref<41x128xf32, #tpu.memory_space<vmem>>, %arg3: memref<16x128xf32, #tpu.memory_space<vmem>>) attributes {dimension_semantics = [#tpu.dimension_semantics<parallel>], iteration_bounds = array<i64: 1>, scalar_prefetch = 0 : i64, scratch_operands = 0 : i64, tpu.core_type = #tpu.core_type<tc>, window_params = [{transform_indices = @transform_0, window_bounds = array<i64: 16, 1>}, {pipeline_mode = #tpu.pipeline_mode<synchronous>, transform_indices = @transform_1, window_bounds = array<i64: 41, 128>}, {transform_indices = @transform_2, window_bounds = array<i64: 16, 128>}]} {
    %c0 = arith.constant 0 : index
    %c0_0 = arith.constant 0 : index
    %0 = vector.load %arg1[%c0, %c0_0] : memref<16x1xi32, #tpu.memory_space<vmem>>, vector<16x1xi32>
    %1 = tpu.iota {dimensions = array<i32: 1>} : vector<16x41xi32>
    %2 = vector.broadcast %0 : vector<16x1xi32> to vector<16x41xi32>
    %3 = arith.cmpi eq, %1, %2 : vector<16x41xi32>
    %4 = arith.extui %3 : vector<16x41xi1> to vector<16x41xi32>
    %5 = arith.sitofp %4 : vector<16x41xi32> to vector<16x41xf32>
    %c0_1 = arith.constant 0 : index
    %c0_2 = arith.constant 0 : index
    %6 = vector.load %arg2[%c0_1, %c0_2] : memref<41x128xf32, #tpu.memory_space<vmem>>, vector<41x128xf32>
    %cst = arith.constant dense<0.000000e+00> : vector<16x128xf32>
    %7 = tpu.matmul %5, %6, %cst {dimension_numbers = #tpu.dot_dimension_numbers<[1], [0], [0], [1], [0, 0, 1, 1], [], []>} : vector<16x41xf32>, vector<41x128xf32>, vector<16x128xf32> -> vector<16x128xf32>
    %c0_3 = arith.constant 0 : index
    %c0_4 = arith.constant 0 : index
    %8 = vector.load %arg3[%c0_3, %c0_4] : memref<16x128xf32, #tpu.memory_space<vmem>>, vector<16x128xf32>
    tpu.vector_store %arg3[%c0_3, %c0_4], %7 {strides = array<i32>} : memref<16x128xf32, #tpu.memory_space<vmem>>, vector<16x128xf32>,
    return
  }
  func.func @transform_0(%arg0: i32) -> (i32, i32) {
    %c0_i32 = arith.constant 0 : i32
    %c0_i32_0 = arith.constant 0 : i32
    return %arg0, %c0_i32 : i32, i32
  }
  func.func @transform_1(%arg0: i32) -> (i32, i32) {
    %c0_i32 = arith.constant 0 : i32
    %c0_i32_0 = arith.constant 0 : i32
    %c0_i32_1 = arith.constant 0 : i32
    return %c0_i32, %c0_i32_0 : i32, i32
  }
  func.func @transform_2(%arg0: i32) -> (i32, i32) {
    %c0_i32 = arith.constant 0 : i32
    %c0_i32_0 = arith.constant 0 : i32
    return %arg0, %c0_i32 : i32, i32
  }
}

</mosaic_0001>

<llo_original>
// kernel: tpu_custom_call.1
$region0: #{tpu_custom_call.1}
  #allocation0 [shape = 'u32[]', space=smem, size = 0x4, offset = 0x4, fixed_abs, tag = 'smem constant byte address 0x4 - core index']
  #allocation1 [shape = 'u32[72,128]{1,0:T(1,128)}', space=vmem, size = 0x9000, scoped, tag = 'internal scratch']
  %s0 = inlined_call_operand.vmem [shape: s32[16,1], index: 0, kind: input, shape index: {}]
  %s1 = inlined_call_operand.hbm [shape: f32[41,128], index: 1, kind: input, shape index: {}]
  %s2 = inlined_call_operand.hbm [shape: f32[16,128], index: 2, kind: output, shape index: {}]
  %s3 = sld [smem:[#allocation0]]
  $region22: #{tpu_custom_call.1} parent=0
    _
  %s5 = ssub.s32 1, %s3
  %s6 = scalar_select 0, %s5, %s3
  $region1: #{tpu_custom_call.1} parent=0
    #allocation2 [shape = 'u8[24576]{0}', space=vmem, size = 0x6000, scoped, tag = 'input window, operand 1, single buffered']
    #allocation3 [shape = 's32[1]{0}', space=sflag, size = 0x4, scoped, tag = 'scoped memory for tpu_custom_call.1']
    #allocation4 [shape = 's32[1]{0}', space=sflag, size = 0x4, scoped, tag = 'scoped memory for tpu_custom_call.1']
    #allocation5 [shape = 'u8[8192]{0}', space=vmem, size = 0x2000, scoped, tag = 'output window, operand 0, single buffered']
    %7 = vsyncpa [#allocation3], 0
    %8 = vsyncpa [#allocation4], 0
    // Predicated region
    $region2: #{tpu_custom_call.1} parent=1 // pred_check
      _
    $region3: #{tpu_custom_call.1} parent=1 // pred_check_branch
      %10 = sbr.rel (0) target = $region5
    $region4: #{tpu_custom_call.1} parent=1 // pred_region
      _
    $region5: #{tpu_custom_call.1} parent=1 // pred_fallthru
      _
    // Predicated region
    $region6: #{tpu_custom_call.1} parent=1 // pred_check
      _
    $region7: #{tpu_custom_call.1} parent=1 // pred_check_branch
      %12 = sbr.rel (0) target = $region9
    $region8: #{tpu_custom_call.1} parent=1 // pred_region
      %14 = vsyncadd [#allocation3], 0
      %s15 = sshll.u32 %s1, 4
      %s16 = int_to_ptr.hbm [resolvable:$true] %s15
      %s17 = sshll.u32 [#allocation2], 4
      %s18 = int_to_ptr.vmem [resolvable:$true] %s17
      %23 = dma.hbm_to_vmem [thread:$0]  %s16, 768, %s18, [#allocation3], 128, 128, 8
    $region9: #{tpu_custom_call.1} parent=1 // pred_fallthru
      _
    // Predicated region
    $region10: #{tpu_custom_call.1} parent=1 // pred_check
      _
    $region11: #{tpu_custom_call.1} parent=1 // pred_check_branch
      %25 = sbr.rel (0) target = $region13
    $region12: #{tpu_custom_call.1} parent=1 // pred_region
      %27 = dma.done [#allocation3], 768
    $region13: #{tpu_custom_call.1} parent=1 // pred_fallthru
      _
    %v28 = vld [vmem:[%s0] sm:$0xff]
    %v29 = vld [vmem:[%s0 + $0x8] sm:$0xff]
    %v30 = vlaneseq
    %v31 = vand.u32 %v30, 127
    %32 = vset.pattern.permute.xlu0 0
    %33 = vperm.xlu0 %32, %v28
    %v34 = vpop.permute.xlu0 %33
    %35 = vset.pattern.permute.xlu0 0
    %36 = vperm.xlu0 %35, %v29
    %v37 = vpop.permute.xlu0 %36
    %vm38 = vcmp.eq.s32.totalorder %v31, %v34
    %vm39 = vcmp.eq.s32.totalorder %v31, %v37
    %v40 = vsel %vm38, 1, 0
    %v41 = vsel %vm39, 1, 0
    %v42 = vcvt.s32.f32 %v40
    %v43 = vcvt.s32.f32 %v41
    %v44 = vld [vmem:[#allocation2] sm:$0xff]
    %v45 = vld [vmem:[#allocation2 + $0x8] sm:$0xff]
    %v46 = vld [vmem:[#allocation2 + $0x10] sm:$0xff]
    %v47 = vld [vmem:[#allocation2 + $0x18] sm:$0xff]
    %v48 = vld [vmem:[#allocation2 + $0x20] sm:$0xff]
    %v49 = vld [vmem:[#allocation2 + $0x28] sm:$0x1]
    %vm50 = vcmask 334848
    %v52 = vsel %vm50, %v42, 0
    %v55 = vsel %vm50, %v43, 0
    %vm57 = vcmask 1040384
    %v59 = vsel %vm57, %v49, 0
    %61 = vmatpush.msra.mxu0 0.0
    %62 = vmatpush.msra.mxu0 0.0
    %63 = vmatpush.msra.mxu0 0.0
    %64 = vmatpush.msra.mxu0 0.0
    %65 = vmatpush.msra.mxu0 0.0
    %66 = vmatpush.msra.mxu0 0.0
    %67 = vmatpush.msra.mxu0 0.0
    %68 = vmatpush.msra.mxu0 0.0
    %69 = vmatpush.msra.mxu0 0.0
    %70 = vmatpush.msra.mxu0 0.0
    %71 = vmatpush.msra.mxu0 %v59
    %72 = vmatpush.msra.mxu0 %v48
    %73 = vmatpush.msra.mxu0 %v47
    %74 = vmatpush.msra.mxu0 %v46
    %75 = vmatpush.msra.mxu0 %v45
    %76 = vmatpush.msra.mxu0 %v44
    %77 = vmatmul.f32.gmra.mxu0 %v52
    %v78 = vpop.f32.mrf.mxu0
    %v79 = vadd.f32 0.0, %v78
    %80 = vmatmul.f32.gmra.mxu0 %v55
    %v81 = vpop.f32.mrf.mxu0
    %v82 = vadd.f32 0.0, %v81
    %83 = vdwg.mxu0
    %84 = vst [vmem:[#allocation5] sm:$0xff] %v79
    %85 = vst [vmem:[#allocation5 + $0x8] sm:$0xff] %v82
    // Predicated region
    $region14: #{tpu_custom_call.1} parent=1 // pred_check
      _
    $region15: #{tpu_custom_call.1} parent=1 // pred_check_branch
      %87 = sbr.rel (0) target = $region17
    $region16: #{tpu_custom_call.1} parent=1 // pred_region
      %89 = vsyncadd [#allocation4], 0
      %s90 = sshll.u32 [#allocation5], 4
      %s91 = int_to_ptr.vmem [resolvable:$true] %s90
      %s92 = sshll.u32 %s2, 4
      %s93 = int_to_ptr.hbm [resolvable:$true] %s92
      %98 = dma.vmem_to_hbm [thread:$0]  %s91, 256, %s93, [#allocation4], 128, 128, 8
    $region17: #{tpu_custom_call.1} parent=1 // pred_fallthru
      _
    // Predicated region
    $region18: #{tpu_custom_call.1} parent=1 // pred_check
      _
    $region19: #{tpu_custom_call.1} parent=1 // pred_check_branch
      %100 = sbr.rel (0) target = $region21
    $region20: #{tpu_custom_call.1} parent=1 // pred_region
      %102 = dma.done [#allocation4], 256
    $region21: #{tpu_custom_call.1} parent=1 // pred_fallthru
      _
    %103 = vsyncpa [#allocation3], 1
    %104 = vsyncpa [#allocation4], 1

</llo_original>
